<compile_context>
chip_gen: v7x
topology: tpu7x:2x2x1
jax: 0.10.0
libtpu: 0.0.40
codegen_flags: <defaults>
</compile_context>

<pallas_src>
import functools

import jax
import jax.numpy as jnp
from jax.experimental import pallas as pl
from jax.experimental.pallas import tpu as pltpu

LANE = 128


def _round_up(x, m):
    return ((x + m - 1) // m) * m


def _pad2(x, rows, cols):
    return jnp.pad(x, ((0, rows - x.shape[0]), (0, cols - x.shape[1])))


def _largest_div_tile(dim, cap):
    """Largest multiple of 128 that divides `dim` (dim is a multiple of 128)."""
    t = min(dim, cap)
    t -= t % LANE
    t = max(t, LANE)
    while dim % t:
        t -= LANE
    return t


def _vmem_plan():
    """Return (tile budget bytes, vmem_limit_bytes) derived from device VMEM size."""
    cap = 64 << 20  # conservative fallback = v7x physical VMEM
    try:
        info = pltpu.get_tpu_info()
        cap = int(getattr(info, "vmem_capacity_bytes", cap))
    except Exception:
        pass
    budget = cap // 2                               # tiles + double buffers live here
    limit = min((cap * 3) // 4, budget + (16 << 20))
    return budget, limit


# -----------------------------------------------------------------------------
# Kernel 1: tiled matmul, f32 VMEM accumulator, optional bias + relu epilogue.
#   out = act(X @ W [+ b])
# RHS is either fully VMEM-resident (full-K block, k-invariant index map, sliced
# in-kernel with pl.ds) or classically k-blocked when it would not fit.
# -----------------------------------------------------------------------------
def _matmul_kernel(*refs, tk, use_relu, use_bias, rhs_resident):
    if use_bias:
        x_ref, w_ref, b_ref, o_ref, acc_ref = refs
    else:
        x_ref, w_ref, o_ref, acc_ref = refs
        b_ref = None

    k = pl.program_id(2)

    @pl.when(k == 0)
    def _():
        acc_ref[...] = jnp.zeros_like(acc_ref)

    if rhs_resident:
        kk = pl.multiple_of(k * tk, tk)
        w = w_ref[pl.ds(kk, tk), :]
    else:
        w = w_ref[...]
    acc_ref[...] += jnp.dot(x_ref[...], w, preferred_element_type=jnp.float32)

    @pl.when(k == pl.num_programs(2) - 1)
    def _():
        h = acc_ref[...]
        if use_bias:
            h = h + b_ref[...].astype(jnp.float32)
        if use_relu:
            h = jnp.maximum(h, 0.0)
        o_ref[...] = h.astype(o_ref.dtype)


def matmul_bias_act(x, w, b=None, *, relu=False, out_dtype=jnp.bfloat16):
    """Tiled (M,K)@(K,N) [+ bias][+relu].  All dims must be multiples of 128."""
    M, K = x.shape
    K2, N = w.shape
    assert K == K2 and M % LANE == 0 and N % LANE == 0 and K % LANE == 0
    use_bias = b is not None

    in_b = x.dtype.itemsize
    w_b = w.dtype.itemsize
    out_b = jnp.dtype(out_dtype).itemsize
    budget, vmem_limit = _vmem_plan()

    tn = _largest_div_tile(N, 256)
    # Keep the whole (K, tn) RHS resident when small: it is then DMA'd once instead of
    # once per row-block of X/A (the dominant HBM stream stays read-exactly-once).
    rhs_resident = (2 * K * tn * w_b) <= budget // 2

    # Pick the largest tm/tk that keep LHS double-buffers + resident RHS + out blocks
    # + f32 accumulator inside the VMEM budget.
    tm_cap, tk_cap = 2048, 4096
    while True:
        tm = _largest_div_tile(M, tm_cap)
        tk = _largest_div_tile(K, tk_cap)
        rhs_cost = 2 * K * tn * w_b if rhs_resident else 2 * tk * tn * w_b
        cost = (rhs_cost
                + 2 * tm * tk * in_b            # double-buffered LHS blocks
                + 2 * tm * tn * out_b           # double-buffered output blocks
                + tm * tn * 4                   # f32 accumulator scratch
                + 2 * tn * 4)                   # bias block (if any)
        if cost <= budget or (tm <= LANE and tk <= LANE):
            break
        if tk_cap >= tm_cap and tk_cap > LANE:
            tk_cap //= 2
        elif tm_cap > LANE:
            tm_cap //= 2
        else:
            tk_cap //= 2

    x_spec = pl.BlockSpec((tm, tk), lambda i, j, k: (i, k))
    if rhs_resident:
        w_spec = pl.BlockSpec((K, tn), lambda i, j, k: (0, j))    # k-invariant, loaded once
    else:
        w_spec = pl.BlockSpec((tk, tn), lambda i, j, k: (k, j))
    in_specs = [x_spec, w_spec]
    args = [x, w]
    if use_bias:
        in_specs.append(pl.BlockSpec((1, tn), lambda i, j, k: (0, j)))
        args.append(b.astype(jnp.float32).reshape(1, N))

    kern = functools.partial(_matmul_kernel, tk=tk, use_relu=relu,
                             use_bias=use_bias, rhs_resident=rhs_resident)

    bytes_accessed = (M * K * in_b + K * N * w_b + M * N * out_b
                      + (N * 4 if use_bias else 0))
    cost_est = pl.CostEstimate(flops=2 * M * N * K, transcendentals=0,
                               bytes_accessed=bytes_accessed)

    return pl.pallas_call(
        kern,
        out_shape=jax.ShapeDtypeStruct((M, N), out_dtype),
        grid=(M // tm, N // tn, K // tk),
        in_specs=in_specs,
        out_specs=pl.BlockSpec((tm, tn), lambda i, j, k: (i, j)),
        scratch_shapes=[pltpu.VMEM((tm, tn), jnp.float32)],
        compiler_params=pltpu.CompilerParams(
            dimension_semantics=("parallel", "parallel", "arbitrary"),
            vmem_limit_bytes=vmem_limit),
        cost_estimate=cost_est,
    )(*args)


# -----------------------------------------------------------------------------
# Kernel 2: fused classifier linear + decoder tail + masked softmax (x2) + mix + log.
#   cls_pred = softmax(cls_feats_idx @ Wc + bc)       (padded class lanes masked)
#   gcn_pred = softmax(ah @ W2 + b2)                  (ah = A[idx] @ hidden)
#   out      = log((gcn_pred + 1e-10)*m + cls_pred*(1-m))
# Tiled over the batch; exact division for the softmax norm (feeds log directly).
# -----------------------------------------------------------------------------
def _fuse_kernel(x_ref, wc_ref, bc_ref, ah_ref, w2_ref, b2_ref, o_ref, *, m, num_classes):
    valid = jax.lax.broadcasted_iota(jnp.int32, o_ref.shape, 1) < num_classes

    cls_logit = jnp.dot(x_ref[...], wc_ref[...],
                        preferred_element_type=jnp.float32) + bc_ref[...]
    cls_logit = jnp.where(valid, cls_logit, -1e30)
    cmx = jnp.max(cls_logit, axis=-1, keepdims=True)
    ce = jnp.exp(cls_logit - cmx)
    cls_pred = ce / jnp.sum(ce, axis=-1, keepdims=True)

    gcn_logit = jnp.dot(ah_ref[...], w2_ref[...].astype(jnp.float32),
                        preferred_element_type=jnp.float32) + b2_ref[...]
    gcn_logit = jnp.where(valid, gcn_logit, -1e30)
    gmx = jnp.max(gcn_logit, axis=-1, keepdims=True)
    ge = jnp.exp(gcn_logit - gmx)
    gcn_pred = ge / jnp.sum(ge, axis=-1, keepdims=True)

    pred = (gcn_pred + 1e-10) * m + cls_pred * (1.0 - m)
    o_ref[...] = jnp.log(pred).astype(o_ref.dtype)


def classifier_decoder_fuse(cls_feats_idx, wc, bc, ah, w2, b2, *, m, num_classes):
    B, F = cls_feats_idx.shape
    C = wc.shape[1]
    H = w2.shape[0]
    tb = _largest_div_tile(B, 512)
    kern = functools.partial(_fuse_kernel, m=float(m), num_classes=int(num_classes))
    return pl.pallas_call(
        kern,
        out_shape=jax.ShapeDtypeStruct((B, C), jnp.float32),
        grid=(B // tb,),
        in_specs=[
            pl.BlockSpec((tb, F), lambda i: (i, 0)),
            pl.BlockSpec((F, C), lambda i: (0, 0)),
            pl.BlockSpec((1, C), lambda i: (0, 0)),
            pl.BlockSpec((tb, H), lambda i: (i, 0)),
            pl.BlockSpec((H, C), lambda i: (0, 0)),
            pl.BlockSpec((1, C), lambda i: (0, 0)),
        ],
        out_specs=pl.BlockSpec((tb, C), lambda i: (i, 0)),
        compiler_params=pltpu.CompilerParams(dimension_semantics=("parallel",)),
    )(cls_feats_idx, wc, bc.astype(jnp.float32).reshape(1, C),
      ah, w2, b2.astype(jnp.float32).reshape(1, C))


# -----------------------------------------------------------------------------
# Full forward (eval mode): pad to lane-dense shapes, run Pallas kernels, slice back.
# -----------------------------------------------------------------------------
def hyper_bert_gcn_forward(params, data, idx, m):
    cls_feats_all = data["cls_feats"]            # (N, F)
    adj = data["adj_train_norm"]                  # (N, N) dense normalized adjacency

    N, F = cls_feats_all.shape
    H = params["w_enc"].shape[1]
    C = params["w_cls"].shape[1]
    B = idx.shape[0]

    Np = _round_up(N, LANE)
    Fp = _round_up(F, LANE)
    Hp = _round_up(H, LANE)
    Cp = _round_up(C, LANE)
    Bp = _round_up(B, LANE)

    # ---- pad (zeros) + cast matmul operands to bf16 (f32 accumulation in-kernel) ----
    x_pad = _pad2(cls_feats_all, Np, Fp).astype(jnp.bfloat16)
    a_pad = _pad2(adj, Np, Np).astype(jnp.bfloat16)
    w1 = _pad2(params["w_enc"], Fp, Hp).astype(jnp.bfloat16)
    b1 = jnp.pad(params["b_enc"], (0, Hp - H)).astype(jnp.float32)
    w2 = _pad2(params["w_dec"], Hp, Cp).astype(jnp.bfloat16)
    b2 = jnp.pad(params["b_dec"], (0, Cp - C)).astype(jnp.float32)
    wc = _pad2(params["w_cls"], Fp, Cp).astype(jnp.bfloat16)
    bc = jnp.pad(params["b_cls"], (0, Cp - C)).astype(jnp.float32)

    idx_pad = jnp.pad(idx, (0, Bp - B))          # padded entries -> row 0 (sliced off)

    # ---- GCN encoder: hidden = relu(A @ (X @ W1) + b1), A read exactly once ----
    xw1 = matmul_bias_act(x_pad, w1, relu=False, out_dtype=jnp.bfloat16)         # (Np, Hp)
    hidden = matmul_bias_act(a_pad, xw1, b1, relu=True, out_dtype=jnp.bfloat16)  # (Np, Hp)

    # ---- GCN decoder (reassociated): gcn_logit[idx] = (A[idx] @ hidden) @ W2 + b2 ----
    a_rows = a_pad[idx_pad]                       # (Bp, Np) gather (glue JAX)
    ah = matmul_bias_act(a_rows, hidden, relu=False, out_dtype=jnp.float32)      # (Bp, Hp)

    # ---- classifier + decoder tail + softmaxes + mix + log (one fused kernel) ----
    cls_feats_idx = _pad2(cls_feats_all[idx_pad], Bp, Fp).astype(jnp.bfloat16)   # (Bp, Fp)
    pred_pad = classifier_decoder_fuse(cls_feats_idx, wc, bc, ah, w2, b2,
                                       m=m, num_classes=C)                       # (Bp, Cp)
    return pred_pad[:B, :C]


# -----------------------------------------------------------------------------
# Pure-JAX reference (f32) for a sanity check.
# -----------------------------------------------------------------------------
def reference_forward(params, data, idx, m):
    x = data["cls_feats"]
    adj = data["adj_train_norm"]
    cls_pred = jax.nn.softmax(x[idx] @ params["w_cls"] + params["b_cls"], axis=1)
    hidden = jax.nn.relu(adj @ (x @ params["w_enc"]) + params["b_enc"])
    logit = adj @ (hidden @ params["w_dec"]) + params["b_dec"]
    gcn_pred = jax.nn.softmax(logit[idx], axis=1)
    return jnp.log((gcn_pred + 1e-10) * m + cls_pred * (1.0 - m))


def _normalized_adjacency(key, n):
    a = (jax.random.uniform(key, (n, n)) < 0.3).astype(jnp.float32)
    a = jnp.maximum(a, a.T)
    a = a + jnp.eye(n, dtype=jnp.float32)
    a = jnp.minimum(a, 1.0)
    d = jnp.sum(a, axis=1)
    d_inv_sqrt = 1.0 / jnp.sqrt(d)
    return a * d_inv_sqrt[:, None] * d_inv_sqrt[None, :]


if __name__ == "__main__":
    # Small shapes consistent with the module's args:
    #   n_nodes=16, feat_dim=32 (stand-in for roberta's 768), hidden=32,
    #   nb_class=8, m=0.7, batch of 8 indexed nodes.
    N_NODES, FEAT_DIM, HIDDEN, NB_CLASS, M = 16, 32, 32, 8, 0.7

    key = jax.random.PRNGKey(0)
    k_feat, k_adj, k_wc, k_bc, k_we, k_be, k_wd, k_bd, k_idx = jax.random.split(key, 9)

    data = {
        "cls_feats": jax.random.normal(k_feat, (N_NODES, FEAT_DIM), jnp.float32),
        "adj_train_norm": _normalized_adjacency(k_adj, N_NODES),
    }
    params = {
        # classifier: Linear(feat_dim, nb_class)
        "w_cls": jax.random.normal(k_wc, (FEAT_DIM, NB_CLASS), jnp.float32) * 0.1,
        "b_cls": jax.random.normal(k_bc, (NB_CLASS,), jnp.float32) * 0.1,
        # GCN encoder layer: feat_dim -> hidden (relu)
        "w_enc": jax.random.normal(k_we, (FEAT_DIM, HIDDEN), jnp.float32) * 0.1,
        "b_enc": jax.random.normal(k_be, (HIDDEN,), jnp.float32) * 0.1,
        # GCN decoder layer: hidden -> nb_class (no act)
        "w_dec": jax.random.normal(k_wd, (HIDDEN, NB_CLASS), jnp.float32) * 0.1,
        "b_dec": jax.random.normal(k_bd, (NB_CLASS,), jnp.float32) * 0.1,
    }
    idx = jax.random.permutation(k_idx, N_NODES)[:8]   # 8 indexed documents/nodes

    pred = hyper_bert_gcn_forward(params, data, idx, M)
    jax.block_until_ready(pred)

    ref = reference_forward(params, data, idx, M)
    jax.block_until_ready(ref)

    assert pred.shape == (8, NB_CLASS)
    assert bool(jnp.all(jnp.isfinite(pred)))
    # bf16 matmul operands (f32 accumulation) -> generous tolerance on log-probs
    assert bool(jnp.allclose(pred, ref, atol=0.1, rtol=0.1))
    print("KERNEL_OK")
</pallas_src>

<mosaic_0001>
module attributes {stable_mosaic.version = 11 : i64} {
  func.func @_matmul_kernel(%arg0: i32, %arg1: i32, %arg2: i32, %arg3: memref<128x128xbf16, #tpu.memory_space<vmem>>, %arg4: memref<128x128xbf16, #tpu.memory_space<vmem>>, %arg5: memref<128x128xbf16, #tpu.memory_space<vmem>>, %arg6: memref<128x128xf32, #tpu.memory_space<vmem>>) attributes {dimension_semantics = [#tpu.dimension_semantics<parallel>, #tpu.dimension_semantics<parallel>, #tpu.dimension_semantics<arbitrary>], iteration_bounds = array<i64: 1, 1, 1>, scalar_prefetch = 0 : i64, scratch_operands = 1 : i64, tpu.core_type = #tpu.core_type<tc>, window_params = [{transform_indices = @transform_0, window_bounds = array<i64: 128, 128>}, {transform_indices = @transform_1, window_bounds = array<i64: 128, 128>}, {transform_indices = @transform_2, window_bounds = array<i64: 128, 128>}]} {
    %c0_i32 = arith.constant 0 : i32
    %0 = arith.cmpi eq, %arg2, %c0_i32 : i32
    %1 = arith.extui %0 : i1 to i32
    %c0_i32_0 = arith.constant 0 : i32
    %2 = arith.cmpi ne, %1, %c0_i32_0 : i32
    scf.if %2 {
      %cst_9 = arith.constant 0.000000e+00 : f32
      %15 = vector.broadcast %cst_9 : f32 to vector<128x128xf32>
      %c0_10 = arith.constant 0 : index
      %c0_11 = arith.constant 0 : index
      %16 = vector.load %arg6[%c0_10, %c0_11] : memref<128x128xf32, #tpu.memory_space<vmem>>, vector<128x128xf32>
      tpu.vector_store %arg6[%c0_10, %c0_11], %15 {strides = array<i32>} : memref<128x128xf32, #tpu.memory_space<vmem>>, vector<128x128xf32>,
    } else {
    }
    %c128_i32 = arith.constant 128 : i32
    %3 = arith.muli %arg2, %c128_i32 : i32
    %4 = tpu.assume_multiple %3, 128 : i32
    %5 = arith.index_cast %4 : i32 to index
    %c0 = arith.constant 0 : index
    %6 = vector.load %arg4[%5, %c0] : memref<128x128xbf16, #tpu.memory_space<vmem>>, vector<128x128xbf16>
    %c0_1 = arith.constant 0 : index
    %c0_2 = arith.constant 0 : index
    %7 = vector.load %arg6[%c0_1, %c0_2] : memref<128x128xf32, #tpu.memory_space<vmem>>, vector<128x128xf32>
    %c0_3 = arith.constant 0 : index
    %c0_4 = arith.constant 0 : index
    %8 = vector.load %arg3[%c0_3, %c0_4] : memref<128x128xbf16, #tpu.memory_space<vmem>>, vector<128x128xbf16>
    %cst = arith.constant dense<0.000000e+00> : vector<128x128xf32>
    %9 = tpu.matmul %8, %6, %cst {dimension_numbers = #tpu.dot_dimension_numbers<[1], [0], [0], [1], [0, 0, 1, 1], [], []>} : vector<128x128xbf16>, vector<128x128xbf16>, vector<128x128xf32> -> vector<128x128xf32>
    %10 = arith.addf %7, %9 : vector<128x128xf32>
    %c0_5 = arith.constant 0 : index
    %c0_6 = arith.constant 0 : index
    %11 = vector.load %arg6[%c0_5, %c0_6] : memref<128x128xf32, #tpu.memory_space<vmem>>, vector<128x128xf32>
    tpu.vector_store %arg6[%c0_5, %c0_6], %10 {strides = array<i32>} : memref<128x128xf32, #tpu.memory_space<vmem>>, vector<128x128xf32>,
    %c0_i32_7 = arith.constant 0 : i32
    %12 = arith.cmpi eq, %arg2, %c0_i32_7 : i32
    %13 = arith.extui %12 : i1 to i32
    %c0_i32_8 = arith.constant 0 : i32
    %14 = arith.cmpi ne, %13, %c0_i32_8 : i32
    scf.if %14 {
      %c0_9 = arith.constant 0 : index
      %c0_10 = arith.constant 0 : index
      %15 = vector.load %arg6[%c0_9, %c0_10] : memref<128x128xf32, #tpu.memory_space<vmem>>, vector<128x128xf32>
      %16 = arith.truncf %15 : vector<128x128xf32> to vector<128x128xbf16>
      %c0_11 = arith.constant 0 : index
      %c0_12 = arith.constant 0 : index
      %17 = vector.load %arg5[%c0_11, %c0_12] : memref<128x128xbf16, #tpu.memory_space<vmem>>, vector<128x128xbf16>
      tpu.vector_store %arg5[%c0_11, %c0_12], %16 {strides = array<i32>} : memref<128x128xbf16, #tpu.memory_space<vmem>>, vector<128x128xbf16>,
    } else {
    }
    return
  }
  func.func @transform_0(%arg0: i32, %arg1: i32, %arg2: i32) -> (i32, i32) {
    %c0_i32 = arith.constant 0 : i32
    return %arg0, %arg2 : i32, i32
  }
  func.func @transform_1(%arg0: i32, %arg1: i32, %arg2: i32) -> (i32, i32) {
    %c0_i32 = arith.constant 0 : i32
    %c0_i32_0 = arith.constant 0 : i32
    return %c0_i32, %arg1 : i32, i32
  }
  func.func @transform_2(%arg0: i32, %arg1: i32, %arg2: i32) -> (i32, i32) {
    %c0_i32 = arith.constant 0 : i32
    return %arg0, %arg1 : i32, i32
  }
}

</mosaic_0001>

<llo_original>
// kernel: tpu_custom_call.1
$region0: #{tpu_custom_call.1}
  #allocation0 [shape = 'u32[]', space=smem, size = 0x4, offset = 0x4, fixed_abs, tag = 'smem constant byte address 0x4 - core index']
  #allocation1 [shape = 'u32[144,128]{1,0:T(1,128)}', space=vmem, size = 0x12000, scoped, tag = 'internal scratch']
  #allocation2 [shape = 'f32[128,128]{1,0:T(8,128)}', space=vmem, size = 0x10000, scoped, tag = 'scratch operand']
  %s0 = inlined_call_operand.hbm [shape: bf16[128,128], index: 0, kind: input, shape index: {}]
  %s1 = inlined_call_operand.hbm [shape: bf16[128,128], index: 1, kind: input, shape index: {}]
  %s2 = inlined_call_operand.hbm [shape: bf16[128,128], index: 2, kind: output, shape index: {}]
  %s3 = sld [smem:[#allocation0]]
  $region34: #{tpu_custom_call.1} parent=0
    _
  %s5 = ssub.s32 1, %s3
  %s6 = scalar_select 0, %s5, %s3
  $region1: #{tpu_custom_call.1} parent=0
    #allocation3 [shape = 'u8[32768]{0}', space=vmem, size = 0x8000, scoped, tag = 'input window, operand 0, single buffered']
    #allocation4 [shape = 's32[1]{0}', space=sflag, size = 0x4, scoped, tag = 'scoped memory for tpu_custom_call.1']
    #allocation5 [shape = 's32[1]{0}', space=sflag, size = 0x4, scoped, tag = 'scoped memory for tpu_custom_call.1']
    #allocation6 [shape = 'u8[32768]{0}', space=vmem, size = 0x8000, scoped, tag = 'input window, operand 1, single buffered']
    #allocation7 [shape = 's32[1]{0}', space=sflag, size = 0x4, scoped, tag = 'scoped memory for tpu_custom_call.1']
    #allocation8 [shape = 'u8[32768]{0}', space=vmem, size = 0x8000, scoped, tag = 'output window, operand 0, single buffered']
    %7 = vsyncpa [#allocation4], 0
    %8 = vsyncpa [#allocation7], 0
    %9 = vsyncpa [#allocation5], 0
    // Predicated region
    $region2: #{tpu_custom_call.1} parent=1 // pred_check
      _
    $region3: #{tpu_custom_call.1} parent=1 // pred_check_branch
      %11 = sbr.rel (0) target = $region5
    $region4: #{tpu_custom_call.1} parent=1 // pred_region
      %s13 = ssub.s32 1024, 1024
      %14 = vsyncadd [#allocation4], %s13
      %s15 = sshll.u32 [#allocation3], 4
      %s16 = int_to_ptr.vmem [resolvable:$true] %s15
      %21 = dma.hbm_to_vmem [thread:$0]  %s0, 1024, %s16, [#allocation4], 64, 64, 4
    $region5: #{tpu_custom_call.1} parent=1 // pred_fallthru
      _
    // Predicated region
    $region6: #{tpu_custom_call.1} parent=1 // pred_check
      _
    $region7: #{tpu_custom_call.1} parent=1 // pred_check_branch
      %23 = sbr.rel (0) target = $region9
    $region8: #{tpu_custom_call.1} parent=1 // pred_region
      %s25 = ssub.s32 1024, 1024
      %26 = vsyncadd [#allocation7], %s25
      %s27 = sshll.u32 [#allocation6], 4
      %s28 = int_to_ptr.vmem [resolvable:$true] %s27
      %33 = dma.hbm_to_vmem [thread:$0]  %s1, 1024, %s28, [#allocation7], 64, 64, 4
    $region9: #{tpu_custom_call.1} parent=1 // pred_fallthru
      _
    // Predicated region
    $region10: #{tpu_custom_call.1} parent=1 // pred_check
      _
    $region11: #{tpu_custom_call.1} parent=1 // pred_check_branch
      %35 = sbr.rel (0) target = $region13
    $region12: #{tpu_custom_call.1} parent=1 // pred_region
      %36 = dma.done [#allocation4], 1024
    $region13: #{tpu_custom_call.1} parent=1 // pred_fallthru
      _
    // Predicated region
    $region14: #{tpu_custom_call.1} parent=1 // pred_check
      _
    $region15: #{tpu_custom_call.1} parent=1 // pred_check_branch
      %38 = sbr.rel (0) target = $region17
    $region16: #{tpu_custom_call.1} parent=1 // pred_region
      %39 = dma.done [#allocation7], 1024
    $region17: #{tpu_custom_call.1} parent=1 // pred_fallthru
      _
    %p41 = scmp.eq.s32.totalorder 0, 0
    // Predicated region
    $region18: #{tpu_custom_call.1} parent=1 // pred_check
      %p42 = pneg %p41
    $region19: #{tpu_custom_call.1} parent=1 // pred_check_branch
      %44 = sbr.rel (%p42) target = $region21
    $region20: #{tpu_custom_call.1} parent=1 // pred_region
      %45 = vst [vmem:[#allocation2] sm:$0xff] 0.0
      %46 = vst [vmem:[#allocation2 + $0x8] sm:$0xff] 0.0
      %47 = vst [vmem:[#allocation2 + $0x10] sm:$0xff] 0.0
      %48 = vst [vmem:[#allocation2 + $0x18] sm:$0xff] 0.0
      %49 = vst [vmem:[#allocation2 + $0x20] sm:$0xff] 0.0
      %50 = vst [vmem:[#allocation2 + $0x28] sm:$0xff] 0.0
      %51 = vst [vmem:[#allocation2 + $0x30] sm:$0xff] 0.0
      %52 = vst [vmem:[#allocation2 + $0x38] sm:$0xff] 0.0
      %53 = vst [vmem:[#allocation2 + $0x40] sm:$0xff] 0.0
      %54 = vst [vmem:[#allocation2 + $0x48] sm:$0xff] 0.0
      %55 = vst [vmem:[#allocation2 + $0x50] sm:$0xff] 0.0
      %56 = vst [vmem:[#allocation2 + $0x58] sm:$0xff] 0.0
      %57 = vst [vmem:[#allocation2 + $0x60] sm:$0xff] 0.0
      %58 = vst [vmem:[#allocation2 + $0x68] sm:$0xff] 0.0
      %59 = vst [vmem:[#allocation2 + $0x70] sm:$0xff] 0.0
      %60 = vst [vmem:[#allocation2 + $0x78] sm:$0xff] 0.0
    $region21: #{tpu_custom_call.1} parent=1 // pred_fallthru
      _
    %s61 = smul.u32 0, 128
    %s62 = sshra.s32 %s61, 3
    %s63 = sand.u32 %s61, 7
    %s64 = smul.addr %s62, 4
    %s65 = scalar_lea.vmem [#allocation6], %s64
    %v66 = vld [vmem:[%s65] sm:$0xf]
    %v67 = vld [vmem:[%s65 + $0x4] sm:$0xf]
    %v68 = vld [vmem:[%s65 + $0x8] sm:$0xf]
    %v69 = vld [vmem:[%s65 + $0xc] sm:$0xf]
    %v70 = vld [vmem:[%s65 + $0x10] sm:$0xf]
    %v71 = vld [vmem:[%s65 + $0x14] sm:$0xf]
    %v72 = vld [vmem:[%s65 + $0x18] sm:$0xf]
    %v73 = vld [vmem:[%s65 + $0x1c] sm:$0xf]
    %v74 = vld [vmem:[%s65 + $0x20] sm:$0xf]
    %v75 = vld [vmem:[%s65 + $0x24] sm:$0xf]
    %v76 = vld [vmem:[%s65 + $0x28] sm:$0xf]
    %v77 = vld [vmem:[%s65 + $0x2c] sm:$0xf]
    %v78 = vld [vmem:[%s65 + $0x30] sm:$0xf]
    %v79 = vld [vmem:[%s65 + $0x34] sm:$0xf]
    %v80 = vld [vmem:[%s65 + $0x38] sm:$0xf]
    %v81 = vld [vmem:[%s65 + $0x3c] sm:$0xf]
    %v82 = vld [vmem:[#allocation2] sm:$0xff]
    %v83 = vld [vmem:[#allocation2 + $0x8] sm:$0xff]
    %v84 = vld [vmem:[#allocation2 + $0x10] sm:$0xff]
    %v85 = vld [vmem:[#allocation2 + $0x18] sm:$0xff]
    %v86 = vld [vmem:[#allocation2 + $0x20] sm:$0xff]
    %v87 = vld [vmem:[#allocation2 + $0x28] sm:$0xff]
    %v88 = vld [vmem:[#allocation2 + $0x30] sm:$0xff]
    %v89 = vld [vmem:[#allocation2 + $0x38] sm:$0xff]
    %v90 = vld [vmem:[#allocation2 + $0x40] sm:$0xff]
    %v91 = vld [vmem:[#allocation2 + $0x48] sm:$0xff]
    %v92 = vld [vmem:[#allocation2 + $0x50] sm:$0xff]
    %v93 = vld [vmem:[#allocation2 + $0x58] sm:$0xff]
    %v94 = vld [vmem:[#allocation2 + $0x60] sm:$0xff]
    %v95 = vld [vmem:[#allocation2 + $0x68] sm:$0xff]
    %v96 = vld [vmem:[#allocation2 + $0x70] sm:$0xff]
    %v97 = vld [vmem:[#allocation2 + $0x78] sm:$0xff]
    %v98 = vld [vmem:[#allocation3] sm:$0xf]
    %v99 = vld [vmem:[#allocation3 + $0x4] sm:$0xf]
    %v100 = vld [vmem:[#allocation3 + $0x8] sm:$0xf]
    %v101 = vld [vmem:[#allocation3 + $0xc] sm:$0xf]
    %v102 = vld [vmem:[#allocation3 + $0x10] sm:$0xf]
    %v103 = vld [vmem:[#allocation3 + $0x14] sm:$0xf]
    %v104 = vld [vmem:[#allocation3 + $0x18] sm:$0xf]
    %v105 = vld [vmem:[#allocation3 + $0x1c] sm:$0xf]
    %v106 = vld [vmem:[#allocation3 + $0x20] sm:$0xf]
    %v107 = vld [vmem:[#allocation3 + $0x24] sm:$0xf]
    %v108 = vld [vmem:[#allocation3 + $0x28] sm:$0xf]
    %v109 = vld [vmem:[#allocation3 + $0x2c] sm:$0xf]
    %v110 = vld [vmem:[#allocation3 + $0x30] sm:$0xf]
    %v111 = vld [vmem:[#allocation3 + $0x34] sm:$0xf]
    %v112 = vld [vmem:[#allocation3 + $0x38] sm:$0xf]
    %v113 = vld [vmem:[#allocation3 + $0x3c] sm:$0xf]
    %v130 = vunpack.c.l.b16 %v98
    %v131 = vunpack.c.l.b16 %v99
    %v132 = vunpack.c.l.b16 %v100
    %v133 = vunpack.c.l.b16 %v101
    %v134 = vunpack.c.l.b16 %v102
    %v135 = vunpack.c.l.b16 %v103
    %v136 = vunpack.c.l.b16 %v104
    %v137 = vunpack.c.l.b16 %v105
    %v138 = vunpack.c.l.b16 %v106
    %v139 = vunpack.c.l.b16 %v107
    %v140 = vunpack.c.l.b16 %v108
    %v141 = vunpack.c.l.b16 %v109
    %v142 = vunpack.c.l.b16 %v110
    %v143 = vunpack.c.l.b16 %v111
    %v144 = vunpack.c.l.b16 %v112
    %v145 = vunpack.c.l.b16 %v113
    %v146 = vpack.c.b16 %v131, %v130
    %v147 = vpack.c.b16 %v133, %v132
    %v148 = vpack.c.b16 %v135, %v134
    %v149 = vpack.c.b16 %v137, %v136
    %v150 = vpack.c.b16 %v139, %v138
    %v151 = vpack.c.b16 %v141, %v140
    %v152 = vpack.c.b16 %v143, %v142
    %v153 = vpack.c.b16 %v145, %v144
    %v178 = vunpack.c.l.b16 %v66
    %v179 = vunpack.c.l.b16 %v67
    %v180 = vunpack.c.l.b16 %v68
    %v181 = vunpack.c.l.b16 %v69
    %v182 = vunpack.c.l.b16 %v70
    %v183 = vunpack.c.l.b16 %v71
    %v184 = vunpack.c.l.b16 %v72
    %v185 = vunpack.c.l.b16 %v73
    %v186 = vunpack.c.l.b16 %v74
    %v187 = vunpack.c.l.b16 %v75
    %v188 = vunpack.c.l.b16 %v76
    %v189 = vunpack.c.l.b16 %v77
    %v190 = vunpack.c.l.b16 %v78
    %v191 = vunpack.c.l.b16 %v79
    %v192 = vunpack.c.l.b16 %v80
    %v193 = vunpack.c.l.b16 %v81
    %v194 = vpack.c.b16 %v179, %v178
    %v195 = vpack.c.b16 %v181, %v180
    %v196 = vpack.c.b16 %v183, %v182
    %v197 = vpack.c.b16 %v185, %v184
    %v198 = vpack.c.b16 %v187, %v186
    %v199 = vpack.c.b16 %v189, %v188
    %v200 = vpack.c.b16 %v191, %v190
    %v201 = vpack.c.b16 %v193, %v192
    %210 = vmatprep.subr.bf16.mxu0 0
    %211 = vmatpush1.bf16.msra.mxu0 %v194
    %212 = vmatprep.subr.bf16.mxu0 0
    %213 = vmatpush1.bf16.msra.mxu0 %v195
    %214 = vmatprep.subr.bf16.mxu0 0
    %215 = vmatpush1.bf16.msra.mxu0 %v196
    %216 = vmatprep.subr.bf16.mxu0 0
    %217 = vmatpush1.bf16.msra.mxu0 %v197
    %218 = vmatprep.subr.bf16.mxu0 0
    %219 = vmatpush1.bf16.msra.mxu0 %v198
    %220 = vmatprep.subr.bf16.mxu0 0
    %221 = vmatpush1.bf16.msra.mxu0 %v199
    %222 = vmatprep.subr.bf16.mxu0 0
    %223 = vmatpush1.bf16.msra.mxu0 %v200
    %224 = vmatprep.subr.bf16.mxu0 0
    %225 = vmatpush1.bf16.msra.mxu0 %v201
    %226 = vmatprep.subr.bf16.mxu0 0
    %227 = vmatpush1.bf16.msra.mxu0 0
    %228 = vmatprep.subr.bf16.mxu0 0
    %229 = vmatpush1.bf16.msra.mxu0 0
    %230 = vmatprep.subr.bf16.mxu0 0
    %231 = vmatpush1.bf16.msra.mxu0 0
    %232 = vmatprep.subr.bf16.mxu0 0
    %233 = vmatpush1.bf16.msra.mxu0 0
    %234 = vmatprep.subr.bf16.mxu0 0
    %235 = vmatpush1.bf16.msra.mxu0 0
    %236 = vmatprep.subr.bf16.mxu0 0
    %237 = vmatpush1.bf16.msra.mxu0 0
    %238 = vmatprep.subr.bf16.mxu0 0
    %239 = vmatpush1.bf16.msra.mxu0 0
    %240 = vmatprep.subr.bf16.mxu0 0
    %241 = vmatpush1.bf16.msra.mxu0 0
    %242 = vmatprep.mubr.bf16.mxu0 0
    %243 = vmatmul.mubr.bf16.gmra.mrb[0].mxu0 %v146
    %v244 = vpop.f32.mrb[0].mxu0
    %v245 = vadd.f32 0.0, %v244
    %v246 = vpop.f32.mrb[0].mxu0
    %v247 = vpop.f32.mrb[0].mxu0
    %v248 = vadd.f32 0.0, %v247
    %v249 = vpop.f32.mrb[0].mxu0
    %250 = vmatprep.mubr.bf16.mxu0 0
    %251 = vmatmul.mubr.bf16.gmra.mrb[0].mxu0 %v147
    %v252 = vpop.f32.mrb[0].mxu0
    %v253 = vadd.f32 0.0, %v252
    %v254 = vpop.f32.mrb[0].mxu0
    %v255 = vpop.f32.mrb[0].mxu0
    %v256 = vadd.f32 0.0, %v255
    %v257 = vpop.f32.mrb[0].mxu0
    %258 = vmatprep.mubr.bf16.mxu0 0
    %259 = vmatmul.mubr.bf16.gmra.mrb[0].mxu0 %v148
    %v260 = vpop.f32.mrb[0].mxu0
    %v261 = vadd.f32 0.0, %v260
    %v262 = vpop.f32.mrb[0].mxu0
    %v263 = vpop.f32.mrb[0].mxu0
    %v264 = vadd.f32 0.0, %v263
    %v265 = vpop.f32.mrb[0].mxu0
    %266 = vmatprep.mubr.bf16.mxu0 0
    %267 = vmatmul.mubr.bf16.gmra.mrb[0].mxu0 %v149
    %v268 = vpop.f32.mrb[0].mxu0
    %v269 = vadd.f32 0.0, %v268
    %v270 = vpop.f32.mrb[0].mxu0
    %v271 = vpop.f32.mrb[0].mxu0
    %v272 = vadd.f32 0.0, %v271
    %v273 = vpop.f32.mrb[0].mxu0
    %274 = vmatprep.mubr.bf16.mxu0 0
    %275 = vmatmul.mubr.bf16.gmra.mrb[0].mxu0 %v150
    %v276 = vpop.f32.mrb[0].mxu0
    %v277 = vadd.f32 0.0, %v276
    %v278 = vpop.f32.mrb[0].mxu0
    %v279 = vpop.f32.mrb[0].mxu0
    %v280 = vadd.f32 0.0, %v279
    %v281 = vpop.f32.mrb[0].mxu0
    %282 = vmatprep.mubr.bf16.mxu0 0
    %283 = vmatmul.mubr.bf16.gmra.mrb[0].mxu0 %v151
    %v284 = vpop.f32.mrb[0].mxu0
    %v285 = vadd.f32 0.0, %v284
    %v286 = vpop.f32.mrb[0].mxu0
    %v287 = vpop.f32.mrb[0].mxu0
    %v288 = vadd.f32 0.0, %v287
    %v289 = vpop.f32.mrb[0].mxu0
    %290 = vmatprep.mubr.bf16.mxu0 0
    %291 = vmatmul.mubr.bf16.gmra.mrb[0].mxu0 %v152
    %v292 = vpop.f32.mrb[0].mxu0
    %v293 = vadd.f32 0.0, %v292
    %v294 = vpop.f32.mrb[0].mxu0
    %v295 = vpop.f32.mrb[0].mxu0
    %v296 = vadd.f32 0.0, %v295
    %v297 = vpop.f32.mrb[0].mxu0
    %298 = vmatprep.mubr.bf16.mxu0 0
    %299 = vmatmul.mubr.bf16.gmra.mrb[0].mxu0 %v153
    %v300 = vpop.f32.mrb[0].mxu0
    %v301 = vadd.f32 0.0, %v300
    %v302 = vpop.f32.mrb[0].mxu0
    %v303 = vpop.f32.mrb[0].mxu0
    %v304 = vadd.f32 0.0, %v303
    %v305 = vpop.f32.mrb[0].mxu0
    %306 = vdwg.mxu0
    %v307 = vadd.f32 %v82, %v245
    %v308 = vadd.f32 %v83, %v248
    %v309 = vadd.f32 %v84, %v253
    %v310 = vadd.f32 %v85, %v256
    %v311 = vadd.f32 %v86, %v261
    %v312 = vadd.f32 %v87, %v264
    %v313 = vadd.f32 %v88, %v269
    %v314 = vadd.f32 %v89, %v272
    %v315 = vadd.f32 %v90, %v277
    %v316 = vadd.f32 %v91, %v280
    %v317 = vadd.f32 %v92, %v285
    %v318 = vadd.f32 %v93, %v288
    %v319 = vadd.f32 %v94, %v293
    %v320 = vadd.f32 %v95, %v296
    %v321 = vadd.f32 %v96, %v301
    %v322 = vadd.f32 %v97, %v304
    %323 = vst [vmem:[#allocation2] sm:$0xff] %v307
    %324 = vst [vmem:[#allocation2 + $0x8] sm:$0xff] %v308
    %325 = vst [vmem:[#allocation2 + $0x10] sm:$0xff] %v309
    %326 = vst [vmem:[#allocation2 + $0x18] sm:$0xff] %v310
    %327 = vst [vmem:[#allocation2 + $0x20] sm:$0xff] %v311
    %328 = vst [vmem:[#allocation2 + $0x28] sm:$0xff] %v312
    %329 = vst [vmem:[#allocation2 + $0x30] sm:$0xff] %v313
    %330 = vst [vmem:[#allocation2 + $0x38] sm:$0xff] %v314
    %331 = vst [vmem:[#allocation2 + $0x40] sm:$0xff] %v315
    %332 = vst [vmem:[#allocation2 + $0x48] sm:$0xff] %v316
    %333 = vst [vmem:[#allocation2 + $0x50] sm:$0xff] %v317
    %334 = vst [vmem:[#allocation2 + $0x58] sm:$0xff] %v318
    %335 = vst [vmem:[#allocation2 + $0x60] sm:$0xff] %v319
    %336 = vst [vmem:[#allocation2 + $0x68] sm:$0xff] %v320
    %337 = vst [vmem:[#allocation2 + $0x70] sm:$0xff] %v321
    %338 = vst [vmem:[#allocation2 + $0x78] sm:$0xff] %v322
    // Predicated region
    $region22: #{tpu_custom_call.1} parent=1 // pred_check
      %p339 = pneg %p41
    $region23: #{tpu_custom_call.1} parent=1 // pred_check_branch
      %341 = sbr.rel (%p339) target = $region25
    $region24: #{tpu_custom_call.1} parent=1 // pred_region
      %v342 = vld [vmem:[#allocation2] sm:$0xff]
      %v343 = vld [vmem:[#allocation2 + $0x8] sm:$0xff]
      %v344 = vld [vmem:[#allocation2 + $0x10] sm:$0xff]
      %v345 = vld [vmem:[#allocation2 + $0x18] sm:$0xff]
      %v346 = vld [vmem:[#allocation2 + $0x20] sm:$0xff]
      %v347 = vld [vmem:[#allocation2 + $0x28] sm:$0xff]
      %v348 = vld [vmem:[#allocation2 + $0x30] sm:$0xff]
      %v349 = vld [vmem:[#allocation2 + $0x38] sm:$0xff]
      %v350 = vld [vmem:[#allocation2 + $0x40] sm:$0xff]
      %v351 = vld [vmem:[#allocation2 + $0x48] sm:$0xff]
      %v352 = vld [vmem:[#allocation2 + $0x50] sm:$0xff]
      %v353 = vld [vmem:[#allocation2 + $0x58] sm:$0xff]
      %v354 = vld [vmem:[#allocation2 + $0x60] sm:$0xff]
      %v355 = vld [vmem:[#allocation2 + $0x68] sm:$0xff]
      %v356 = vld [vmem:[#allocation2 + $0x70] sm:$0xff]
      %v357 = vld [vmem:[#allocation2 + $0x78] sm:$0xff]
      %v358 = vpack.c.bf16 %v343, %v342
      %v359 = vpack.c.bf16 %v345, %v344
      %v360 = vpack.c.bf16 %v347, %v346
      %v361 = vpack.c.bf16 %v349, %v348
      %v362 = vpack.c.bf16 %v351, %v350
      %v363 = vpack.c.bf16 %v353, %v352
      %v364 = vpack.c.bf16 %v355, %v354
      %v365 = vpack.c.bf16 %v357, %v356
      %v374 = vunpack.c.l.b16 %v358
      %v375 = vunpack.c.h.b16 %v358
      %v376 = vunpack.c.l.b16 %v359
      %v377 = vunpack.c.h.b16 %v359
      %v378 = vunpack.c.l.b16 %v360
      %v379 = vunpack.c.h.b16 %v360
      %v380 = vunpack.c.l.b16 %v361
      %v381 = vunpack.c.h.b16 %v361
      %v382 = vunpack.c.l.b16 %v362
      %v383 = vunpack.c.h.b16 %v362
      %v384 = vunpack.c.l.b16 %v363
      %v385 = vunpack.c.h.b16 %v363
      %v386 = vunpack.c.l.b16 %v364
      %v387 = vunpack.c.h.b16 %v364
      %v388 = vunpack.c.l.b16 %v365
      %v389 = vunpack.c.h.b16 %v365
      %v390 = vpack.c.b16 %v374, %v374
      %v391 = vpack.c.b16 %v375, %v375
      %v392 = vpack.c.b16 %v376, %v376
      %v393 = vpack.c.b16 %v377, %v377
      %v394 = vpack.c.b16 %v378, %v378
      %v395 = vpack.c.b16 %v379, %v379
      %v396 = vpack.c.b16 %v380, %v380
      %v397 = vpack.c.b16 %v381, %v381
      %v398 = vpack.c.b16 %v382, %v382
      %v399 = vpack.c.b16 %v383, %v383
      %v400 = vpack.c.b16 %v384, %v384
      %v401 = vpack.c.b16 %v385, %v385
      %v402 = vpack.c.b16 %v386, %v386
      %v403 = vpack.c.b16 %v387, %v387
      %v404 = vpack.c.b16 %v388, %v388
      %v405 = vpack.c.b16 %v389, %v389
      %422 = vst [vmem:[#allocation8] sm:$0xf] %v390
      %423 = vst [vmem:[#allocation8 + $0x4] sm:$0xf] %v391
      %424 = vst [vmem:[#allocation8 + $0x8] sm:$0xf] %v392
      %425 = vst [vmem:[#allocation8 + $0xc] sm:$0xf] %v393
      %426 = vst [vmem:[#allocation8 + $0x10] sm:$0xf] %v394
      %427 = vst [vmem:[#allocation8 + $0x14] sm:$0xf] %v395
      %428 = vst [vmem:[#allocation8 + $0x18] sm:$0xf] %v396
      %429 = vst [vmem:[#allocation8 + $0x1c] sm:$0xf] %v397
      %430 = vst [vmem:[#allocation8 + $0x20] sm:$0xf] %v398
      %431 = vst [vmem:[#allocation8 + $0x24] sm:$0xf] %v399
      %432 = vst [vmem:[#allocation8 + $0x28] sm:$0xf] %v400
      %433 = vst [vmem:[#allocation8 + $0x2c] sm:$0xf] %v401
      %434 = vst [vmem:[#allocation8 + $0x30] sm:$0xf] %v402
      %435 = vst [vmem:[#allocation8 + $0x34] sm:$0xf] %v403
      %436 = vst [vmem:[#allocation8 + $0x38] sm:$0xf] %v404
      %437 = vst [vmem:[#allocation8 + $0x3c] sm:$0xf] %v405
    $region25: #{tpu_custom_call.1} parent=1 // pred_fallthru
      _
    // Predicated region
    $region26: #{tpu_custom_call.1} parent=1 // pred_check
      _
    $region27: #{tpu_custom_call.1} parent=1 // pred_check_branch
      %439 = sbr.rel (0) target = $region29
    $region28: #{tpu_custom_call.1} parent=1 // pred_region
      %s441 = ssub.s32 1024, 1024
      %442 = vsyncadd [#allocation5], %s441
      %s443 = sshll.u32 [#allocation8], 4
      %s444 = int_to_ptr.vmem [resolvable:$true] %s443
      %449 = dma.vmem_to_hbm [thread:$0]  %s444, 1024, %s2, [#allocation5], 64, 64, 4
    $region29: #{tpu_custom_call.1} parent=1 // pred_fallthru
      _
    // Predicated region
    $region30: #{tpu_custom_call.1} parent=1 // pred_check
      _
    $region31: #{tpu_custom_call.1} parent=1 // pred_check_branch
      %451 = sbr.rel (0) target = $region33
    $region32: #{tpu_custom_call.1} parent=1 // pred_region
      %452 = dma.done [#allocation5], 1024
    $region33: #{tpu_custom_call.1} parent=1 // pred_fallthru
      _
    %453 = vsyncpa [#allocation4], 1
    %454 = vsyncpa [#allocation7], 1
    %455 = vsyncpa [#allocation5], 1

</llo_original>
